<compile_context>
chip_gen: v5e
topology: v5e:2x2
jax: 0.10.0
libtpu: 0.0.40
codegen_flags: <defaults>
</compile_context>

<pallas_src>
import jax
import jax.numpy as jnp
from jax.experimental import pallas as pl
from jax.experimental.pallas import tpu as pltpu


def _round_up(x, m):
    return ((x + m - 1) // m) * m


# --------------------------- hardware-aware sizing ---------------------------


def _sublane_multiple(dtype):
    """Rows per packed sublane group: 8 (f32), 16 (bf16), 32 (int8/fp8)."""
    itemsize = max(1, jnp.dtype(dtype).itemsize)
    return 8 * max(1, 4 // itemsize)


def _hw_params():
    """(vmem_limit_bytes, target_block_bytes, num_tensorcores) for this chip."""
    vmem_phys = 64 * 1024 * 1024
    cores = 1
    try:
        info = pltpu.get_tpu_info()
        vmem_phys = int(getattr(info, "vmem_capacity_bytes", vmem_phys) or vmem_phys)
        for attr in ("num_cores", "core_count", "tensorcore_count", "num_tensorcores"):
            v = getattr(info, attr, None)
            if v:
                cores = max(cores, int(v))
                break
    except Exception:
        pass
    if cores == 1:
        try:
            if "v7" in jax.devices()[0].device_kind.lower():
                cores = 2
        except Exception:
            pass
    if vmem_phys >= 96 * 1024 * 1024:
        # v5e / v6e: 128 MiB physical VMEM -> big blocks, generous scoped limit.
        return 96 * 1024 * 1024, 4 * 1024 * 1024, cores
    # v7x (64 MiB per TC) or unknown: stay conservative on VMEM, still ~2x the
    # old 1 MiB blocks so the per-step overhead is small vs 3.2 TB/s HBM.
    return 44 * 1024 * 1024, 2 * 1024 * 1024, cores


# ----------------------------- kernels ---------------------------------------


def _softmax_rows_kernel(x_ref, o_ref):
    # x_ref/o_ref: (rows, Sk) -- softmax over the last (lane) axis, f32 math.
    x = x_ref[...].astype(jnp.float32)
    m = jnp.max(x, axis=-1, keepdims=True)
    e = jnp.exp(x - m)
    s = jnp.sum(e, axis=-1, keepdims=True)
    o_ref[...] = (e * (1.0 / s)).astype(o_ref.dtype)


def _softmax_mask_kernel(x_ref, mask_ref, o_ref):
    # x_ref/o_ref: (1, TH, TQ, Sk); mask_ref has 1s on broadcast dims.
    x = x_ref[...].astype(jnp.float32) + mask_ref[...].astype(jnp.float32)
    m = jnp.max(x, axis=-1, keepdims=True)
    e = jnp.exp(x - m)
    s = jnp.sum(e, axis=-1, keepdims=True)
    o_ref[...] = (e * (1.0 / s)).astype(o_ref.dtype)


# --------------------------- tile selection -----------------------------------


def _row_tile(n_rows, sk, dtype, block_bytes, cores):
    """Large row tile, rounded to the dtype's sublane packing."""
    itemsize = jnp.dtype(dtype).itemsize
    sub = _sublane_multiple(dtype)
    rows = max(1, block_bytes // max(sk * itemsize, 1))
    rows = min(rows, n_rows)
    if rows < n_rows:
        rows = max(sub, (rows // sub) * sub)
    elif cores > 1 and n_rows > sub:
        # split into >=2 blocks only when there are multiple TensorCores to feed
        rows = min(n_rows, max(sub, _round_up(pl.cdiv(n_rows, cores), sub)))
    return rows


def _mask_tiles(num_heads, sq, sk, dtype, block_bytes):
    """(heads-per-block, query-rows-per-block) for the masked path."""
    itemsize = jnp.dtype(dtype).itemsize
    sub = _sublane_multiple(dtype)
    elems = max(1, block_bytes // itemsize)
    tq = max(1, elems // max(sk, 1))
    tq = min(tq, sq)
    if tq < sq:
        tq = max(sub, (tq // sub) * sub)
    th = max(1, elems // max(tq * sk, 1))
    th = min(th, num_heads)
    return th, tq


# ----------------------------- wrappers ---------------------------------------


def _softmax_rows(x2d, vmem_limit, block_bytes, cores):
    n_rows, sk = x2d.shape
    tr = _row_tile(n_rows, sk, x2d.dtype, block_bytes, cores)
    spec = pl.BlockSpec((tr, sk), lambda i: (i, 0))
    return pl.pallas_call(
        _softmax_rows_kernel,
        out_shape=jax.ShapeDtypeStruct(x2d.shape, x2d.dtype),
        grid=(pl.cdiv(n_rows, tr),),
        in_specs=[spec],
        out_specs=spec,
        compiler_params=pltpu.CompilerParams(
            dimension_semantics=("parallel",),
            vmem_limit_bytes=vmem_limit),
    )(x2d)


def _softmax_masked(x, mask, vmem_limit, block_bytes, cores):
    b, h, sq, sk = x.shape
    # Normalize the mask to 4-D WITHOUT materializing any broadcast: size-1
    # dims stay size-1 and are broadcast via the BlockSpec + in-kernel add.
    mask = mask.reshape((1,) * (4 - mask.ndim) + mask.shape)
    mb, mh, msq, msk = mask.shape

    th, tq = _mask_tiles(h, sq, sk, x.dtype, block_bytes)
    n_q = pl.cdiv(sq, tq)
    grid = (b, n_q, pl.cdiv(h, th))

    x_spec = pl.BlockSpec((1, th, tq, sk), lambda bi, qi, hi: (bi, hi, qi, 0))

    mask_block = (1,
                  th if mh != 1 else 1,
                  tq if msq != 1 else 1,
                  sk if msk != 1 else 1)

    def mask_map(bi, qi, hi):
        return (bi if mb != 1 else 0,
                hi if mh != 1 else 0,
                qi if msq != 1 else 0,
                0)

    mask_spec = pl.BlockSpec(mask_block, mask_map)

    # Keep the head axis "arbitrary" so a head-broadcast mask block stays
    # resident in VMEM (not re-DMA'd per head chunk); flip it to "parallel"
    # only when the outer parallel extent can't feed every TensorCore.
    head_sem = "arbitrary" if b * n_q >= cores else "parallel"

    return pl.pallas_call(
        _softmax_mask_kernel,
        out_shape=jax.ShapeDtypeStruct(x.shape, x.dtype),
        grid=grid,
        in_specs=[x_spec, mask_spec],
        out_specs=x_spec,
        compiler_params=pltpu.CompilerParams(
            dimension_semantics=("parallel", "parallel", head_sem),
            vmem_limit_bytes=vmem_limit),
    )(x, mask)


def quant_softmax(attn_weights, attn_mask=None, use_act_quant=False):
    """Pallas equivalent of QuantSoftmax.forward (dim=-1, fp32 softmax)."""
    if use_act_quant:
        # TODO(synk): Quantizer(**{}) forward semantics are not defined by the
        # provided module; refusing rather than silently returning plain softmax.
        raise NotImplementedError("QuantSoftmax use_act_quant=True is not implemented")

    b, h, sq, sk = attn_weights.shape
    vmem_limit, block_bytes, cores = _hw_params()

    # Keep output stores lane-dense: pad Sk to a multiple of 128 with -inf
    # logits (exp(-inf)=0) only when needed; typical attention Sk is aligned.
    sk_pad = _round_up(sk, 128)
    padded = sk_pad != sk
    if padded:
        pad = jnp.full((b, h, sq, sk_pad - sk), -jnp.inf, attn_weights.dtype)
        attn_weights = jnp.concatenate([attn_weights, pad], axis=-1)
        if attn_mask is not None and attn_mask.shape[-1] == sk:
            mzero = jnp.zeros(attn_mask.shape[:-1] + (sk_pad - sk,), attn_mask.dtype)
            attn_mask = jnp.concatenate([attn_mask, mzero], axis=-1)

    if attn_mask is None:
        out = _softmax_rows(attn_weights.reshape(b * h * sq, sk_pad),
                            vmem_limit, block_bytes, cores)
        out = out.reshape(b, h, sq, sk_pad)
    else:
        out = _softmax_masked(attn_weights, attn_mask,
                              vmem_limit, block_bytes, cores)

    if padded:
        out = out[..., :sk]
    return out


# ----------------------------- reference / demo -------------------------------


def _reference(attn_weights, attn_mask=None):
    x = attn_weights.astype(jnp.float32)
    if attn_mask is not None:
        x = x + attn_mask.astype(jnp.float32)
    return jax.nn.softmax(x, axis=-1).astype(attn_weights.dtype)


if __name__ == "__main__":
    key = jax.random.PRNGKey(0)
    k1, k2 = jax.random.split(key)

    B, H, Sq, Sk = 2, 4, 16, 128
    attn = jax.random.normal(k1, (B, H, Sq, Sk), dtype=jnp.float32).astype(jnp.bfloat16)
    # additive mask, (B, 1, Sq, Sk), broadcast over heads (never materialized)
    mask_bits = jax.random.bernoulli(k2, p=0.1, shape=(B, 1, Sq, Sk))
    mask = jnp.where(mask_bits, jnp.float32(-1e9), jnp.float32(0.0)).astype(jnp.bfloat16)

    out = jax.block_until_ready(quant_softmax(attn, mask))
    ref = _reference(attn, mask)
    assert out.shape == (B, H, Sq, Sk)
    assert out.dtype == attn.dtype
    err = jnp.max(jnp.abs(out.astype(jnp.float32) - ref.astype(jnp.float32)))
    assert float(err) < 2e-2, f"max abs err {float(err)}"

    # no-mask (flattened row-tile) path
    out2 = jax.block_until_ready(quant_softmax(attn, None))
    ref2 = _reference(attn, None)
    err2 = jnp.max(jnp.abs(out2.astype(jnp.float32) - ref2.astype(jnp.float32)))
    assert float(err2) < 2e-2, f"max abs err {float(err2)}"

    # mask with extra broadcast dims ((1, 1, Sq, Sk)) to exercise the
    # no-materialization broadcast path on more than one axis
    mask_b1 = mask[:1]
    out3 = jax.block_until_ready(quant_softmax(attn, mask_b1))
    ref3 = _reference(attn, jnp.broadcast_to(mask_b1, (B, 1, Sq, Sk)))
    err3 = jnp.max(jnp.abs(out3.astype(jnp.float32) - ref3.astype(jnp.float32)))
    assert float(err3) < 2e-2, f"max abs err {float(err3)}"

    print("KERNEL_OK")
</pallas_src>

<mosaic_0001>
module attributes {stable_mosaic.version = 11 : i64} {
  func.func @_softmax_mask_kernel(%arg0: i32, %arg1: i32, %arg2: i32, %arg3: memref<1x4x16x128xbf16, #tpu.memory_space<vmem>>, %arg4: memref<1x1x16x128xbf16, #tpu.memory_space<vmem>>, %arg5: memref<1x4x16x128xbf16, #tpu.memory_space<vmem>>) attributes {dimension_semantics = [#tpu.dimension_semantics<parallel>, #tpu.dimension_semantics<parallel>, #tpu.dimension_semantics<arbitrary>], iteration_bounds = array<i64: 2, 1, 1>, scalar_prefetch = 0 : i64, scratch_operands = 0 : i64, tpu.core_type = #tpu.core_type<tc>, window_params = [{transform_indices = @transform_0, window_bounds = array<i64: 1, 4, 16, 128>}, {transform_indices = @transform_1, window_bounds = array<i64: 1, 1, 16, 128>}, {transform_indices = @transform_2, window_bounds = array<i64: 1, 4, 16, 128>}]} {
    %c0 = arith.constant 0 : index
    %c0_0 = arith.constant 0 : index
    %c0_1 = arith.constant 0 : index
    %c0_2 = arith.constant 0 : index
    %0 = vector.load %arg3[%c0, %c0_0, %c0_1, %c0_2] : memref<1x4x16x128xbf16, #tpu.memory_space<vmem>>, vector<1x4x16x128xbf16>
    %1 = arith.extf %0 : vector<1x4x16x128xbf16> to vector<1x4x16x128xf32>
    %c0_3 = arith.constant 0 : index
    %c0_4 = arith.constant 0 : index
    %c0_5 = arith.constant 0 : index
    %c0_6 = arith.constant 0 : index
    %2 = vector.load %arg4[%c0_3, %c0_4, %c0_5, %c0_6] : memref<1x1x16x128xbf16, #tpu.memory_space<vmem>>, vector<1x1x16x128xbf16>
    %3 = arith.extf %2 : vector<1x1x16x128xbf16> to vector<1x1x16x128xf32>
    %4 = vector.broadcast %3 : vector<1x1x16x128xf32> to vector<1x4x16x128xf32>
    %5 = arith.addf %1, %4 : vector<1x4x16x128xf32>
    %cst = arith.constant dense<0xFF800000> : vector<1x4x16xf32>
    %6 = vector.multi_reduction <maximumf>, %5, %cst [3] : vector<1x4x16x128xf32> to vector<1x4x16xf32>
    %7 = vector.shape_cast %6 : vector<1x4x16xf32> to vector<1x4x16x1xf32>
    %8 = vector.broadcast %7 : vector<1x4x16x1xf32> to vector<1x4x16x128xf32>
    %9 = arith.subf %5, %8 : vector<1x4x16x128xf32>
    %10 = math.exp %9 : vector<1x4x16x128xf32>
    %cst_7 = arith.constant dense<0.000000e+00> : vector<1x4x16xf32>
    %11 = vector.multi_reduction <add>, %10, %cst_7 [3] : vector<1x4x16x128xf32> to vector<1x4x16xf32>
    %12 = vector.shape_cast %11 : vector<1x4x16xf32> to vector<1x4x16x1xf32>
    %cst_8 = arith.constant 1.000000e+00 : f32
    %13 = vector.broadcast %cst_8 : f32 to vector<1x4x16x1xf32>
    %14 = arith.divf %13, %12 : vector<1x4x16x1xf32>
    %15 = vector.broadcast %14 : vector<1x4x16x1xf32> to vector<1x4x16x128xf32>
    %16 = arith.mulf %10, %15 : vector<1x4x16x128xf32>
    %17 = arith.truncf %16 : vector<1x4x16x128xf32> to vector<1x4x16x128xbf16>
    %c0_9 = arith.constant 0 : index
    %c0_10 = arith.constant 0 : index
    %c0_11 = arith.constant 0 : index
    %c0_12 = arith.constant 0 : index
    %18 = vector.load %arg5[%c0_9, %c0_10, %c0_11, %c0_12] : memref<1x4x16x128xbf16, #tpu.memory_space<vmem>>, vector<1x4x16x128xbf16>
    tpu.vector_store %arg5[%c0_9, %c0_10, %c0_11, %c0_12], %17 {strides = array<i32>} : memref<1x4x16x128xbf16, #tpu.memory_space<vmem>>, vector<1x4x16x128xbf16>,
    return
  }
  func.func @transform_0(%arg0: i32, %arg1: i32, %arg2: i32) -> (i32, i32, i32, i32) {
    %c0_i32 = arith.constant 0 : i32
    %c0_i32_0 = arith.constant 0 : i32
    return %arg0, %arg2, %arg1, %c0_i32 : i32, i32, i32, i32
  }
  func.func @transform_1(%arg0: i32, %arg1: i32, %arg2: i32) -> (i32, i32, i32, i32) {
    %c0_i32 = arith.constant 0 : i32
    %c0_i32_0 = arith.constant 0 : i32
    %c0_i32_1 = arith.constant 0 : i32
    return %arg0, %c0_i32, %arg1, %c0_i32_0 : i32, i32, i32, i32
  }
  func.func @transform_2(%arg0: i32, %arg1: i32, %arg2: i32) -> (i32, i32, i32, i32) {
    %c0_i32 = arith.constant 0 : i32
    %c0_i32_0 = arith.constant 0 : i32
    return %arg0, %arg2, %arg1, %c0_i32 : i32, i32, i32, i32
  }
}

</mosaic_0001>

<llo_original>
// kernel: tpu_custom_call.1
$region0: #{tpu_custom_call.1}
  #allocation0 [shape = 'u32[]', space=smem, size = 0x4, offset = 0x4, fixed_abs, tag = 'smem constant byte address 0x4 - core index']
  #allocation1 [shape = 'u32[72,128]{1,0:T(1,128)}', space=vmem, size = 0x9000, scoped, tag = 'internal scratch']
  %s0 = inlined_call_operand.hbm [shape: bf16[2,4,16,128], index: 0, kind: input, shape index: {}]
  %s1 = inlined_call_operand.hbm [shape: bf16[2,1,16,128], index: 1, kind: input, shape index: {}]
  %s2 = inlined_call_operand.hbm [shape: bf16[2,4,16,128], index: 2, kind: output, shape index: {}]
  %s3 = sld [smem:[#allocation0]]
  $region49: #{tpu_custom_call.1} parent=0
    _
  %s5 = ssub.s32 1, %s3
  %s6 = scalar_select 0, %s5, %s3
  $region1: #{tpu_custom_call.1} parent=0
    #allocation2 [shape = 'u8[32768]{0}', space=vmem, size = 0x8000, scoped, tag = 'input window, operand 0']
    #allocation3 [shape = 's32[2]{0}', space=sflag, size = 0x8, scoped, tag = 'scoped memory for tpu_custom_call.1']
    #allocation4 [shape = 's32[2]{0}', space=sflag, size = 0x8, scoped, tag = 'scoped memory for tpu_custom_call.1']
    #allocation5 [shape = 'u8[8192]{0}', space=vmem, size = 0x2000, scoped, tag = 'input window, operand 1']
    #allocation6 [shape = 's32[2]{0}', space=sflag, size = 0x8, scoped, tag = 'scoped memory for tpu_custom_call.1']
    #allocation7 [shape = 'u8[32768]{0}', space=vmem, size = 0x8000, scoped, tag = 'output window, operand 0']
    %7 = vsyncpa [#allocation3], 0
    %s8 = scalar_lea.sflag [#allocation3], 1
    %9 = vsyncpa %s8, 0
    %10 = vsyncpa [#allocation6], 0
    %s11 = scalar_lea.sflag [#allocation6], 1
    %12 = vsyncpa %s11, 0
    %13 = vsyncpa [#allocation4], 0
    %s14 = scalar_lea.sflag [#allocation4], 1
    %15 = vsyncpa %s14, 0
    loop: start=0, step=1, limit=4
    $region2: #{tpu_custom_call.1} parent=1 // loop_pre_header
      _
    $region3: #{tpu_custom_call.1} parent=1 // loop_header
      %s17 = sphi 0, %s21
      %p18 = scmp.ge.s32.totalorder %s17, 4
      %s24 = sphi 0, %s43
      %s25 = sphi 0, %s39
      %s26 = sphi 0, %s35
      %s27 = sphi 0, %s24
      %s28 = sphi 0, %s25
      %s29 = sphi 0, %s26
      %s30 = sphi 0, %s27
      %s31 = sphi 0, %s28
      %s32 = sphi 0, %s29
      %s50 = sphi 0, %s52
      %s53 = sphi 0, %s50
      %s54 = sphi 0, %s53
      %s70 = sphi 0, %s54
      %s78 = sphi 0, %s80
      %s81 = sphi 0, %s78
      %s82 = sphi 0, %s81
      %s98 = sphi 0, %s82
      %s108 = sphi 0, %s110
      %s111 = sphi 0, %s108
      %s112 = sphi 0, %s111
      %s128 = sphi 0, %s112
    $region4: #{tpu_custom_call.1} parent=1 // loop_header_branch
      %20 = sbr.rel (%p18) target = $region8
    $region5: #{tpu_custom_call.1} parent=1 // loop_body
      %s22 = ssub.s32 %s17, 1
      %s23 = ssub.s32 %s17, 2
      %s33 = sadd.s32 1, %s26
      %p34 = scmp.ge.s32.totalorder %s33, 1
      %s35 = scalar_select %p34, 0, %s33
      %s36 = sadd.s32 1, %s25
      %s37 = scalar_select %p34, %s36, %s25
      %p38 = scmp.ge.s32.totalorder %s37, 1
      %s39 = scalar_select %p38, 0, %s37
      %s40 = sadd.s32 1, %s24
      %s41 = scalar_select %p38, %s40, %s24
      %p42 = scmp.ge.s32.totalorder %s41, 2
      %s43 = scalar_select %p42, 0, %s41
      %s44 = ssub.s32 %s24, %s43
      %s45 = ssub.s32 %s26, %s35
      %s46 = sor.u32 %s44, %s45
      %s47 = ssub.s32 %s25, %s39
      %s48 = sor.u32 %s46, %s47
      %p49 = scmp.eq.s32.totalorder %s48, 0
      %s51 = sadd.s32 %s50, 1
      %s52 = scalar_select %p49, %s50, %s51
      %p55 = pneg %p49
      %p56 = scmp.eq.s32.totalorder %s17, 1
      %p57 = por %p55, %p56
      %p58 = scmp.ne.s32.totalorder %s50, %s53
      %p59 = scmp.eq.s32.totalorder %s17, 0
      %p60 = por %p58, %p59
      %p61 = scmp.ne.s32.totalorder %s50, %s53
      %p62 = scmp.eq.s32.totalorder %s22, 1
      %p63 = por %p61, %p62
      %p64 = scmp.ne.s32.totalorder %s53, %s54
      %p65 = scmp.eq.s32.totalorder %s22, 0
      %p66 = por %p64, %p65
      %p67 = scmp.ne.s32.totalorder %s53, %s54
      %p68 = scmp.eq.s32.totalorder %s23, 1
      %p69 = por %p67, %p68
      %p71 = scmp.ne.s32.totalorder %s54, %s70
      %p72 = scmp.eq.s32.totalorder %s23, 0
      %p73 = por %p71, %p72
      %s74 = ssub.s32 %s24, %s43
      %s75 = ssub.s32 %s25, %s39
      %s76 = sor.u32 %s74, %s75
      %p77 = scmp.eq.s32.totalorder %s76, 0
      %s79 = sadd.s32 %s78, 1
      %s80 = scalar_select %p77, %s78, %s79
      %p83 = pneg %p77
      %p84 = scmp.eq.s32.totalorder %s17, 1
      %p85 = por %p83, %p84
      %p86 = scmp.ne.s32.totalorder %s78, %s81
      %p87 = scmp.eq.s32.totalorder %s17, 0
      %p88 = por %p86, %p87
      %p89 = scmp.ne.s32.totalorder %s78, %s81
      %p90 = scmp.eq.s32.totalorder %s22, 1
      %p91 = por %p89, %p90
      %p92 = scmp.ne.s32.totalorder %s81, %s82
      %p93 = scmp.eq.s32.totalorder %s22, 0
      %p94 = por %p92, %p93
      %p95 = scmp.ne.s32.totalorder %s81, %s82
      %p96 = scmp.eq.s32.totalorder %s23, 1
      %p97 = por %p95, %p96
      %p99 = scmp.ne.s32.totalorder %s82, %s98
      %p100 = scmp.eq.s32.totalorder %s23, 0
      %p101 = por %p99, %p100
      %s102 = ssub.s32 %s24, %s43
      %s103 = ssub.s32 %s26, %s35
      %s104 = sor.u32 %s102, %s103
      %s105 = ssub.s32 %s25, %s39
      %s106 = sor.u32 %s104, %s105
      %p107 = scmp.eq.s32.totalorder %s106, 0
      %s109 = sadd.s32 %s108, 1
      %s110 = scalar_select %p107, %s108, %s109
      %p113 = pneg %p107
      %p114 = scmp.eq.s32.totalorder %s17, 1
      %p115 = por %p113, %p114
      %p116 = scmp.ne.s32.totalorder %s108, %s111
      %p117 = scmp.eq.s32.totalorder %s17, 0
      %p118 = por %p116, %p117
      %p119 = scmp.ne.s32.totalorder %s108, %s111
      %p120 = scmp.eq.s32.totalorder %s22, 1
      %p121 = por %p119, %p120
      %p122 = scmp.ne.s32.totalorder %s111, %s112
      %p123 = scmp.eq.s32.totalorder %s22, 0
      %p124 = por %p122, %p123
      %p125 = scmp.ne.s32.totalorder %s111, %s112
      %p126 = scmp.eq.s32.totalorder %s23, 1
      %p127 = por %p125, %p126
      %p129 = scmp.ne.s32.totalorder %s112, %s128
      %p130 = scmp.eq.s32.totalorder %s23, 0
      %p131 = por %p129, %p130
      %p132 = scmp.le.s32.totalorder 1, %s17
      %p133 = scmp.lt.s32.totalorder %s17, 3
      %p134 = pnand %p132, %p133
      %p135 = pneg %p134
      // Predicated region
      $region9: #{tpu_custom_call.1} parent=5 // pred_check
        _
      $region10: #{tpu_custom_call.1} parent=5 // pred_check_branch
        %137 = sbr.rel (%p134) target = $region12
      $region11: #{tpu_custom_call.1} parent=5 // pred_region
        %s138 = ssub.s32 %s17, 1
      $region12: #{tpu_custom_call.1} parent=5 // pred_fallthru
        _
      %p139 = scmp.lt.s32.totalorder %s17, 2
      // Predicated region
      $region13: #{tpu_custom_call.1} parent=5 // pred_check
        %p140 = pneg %p139
      $region14: #{tpu_custom_call.1} parent=5 // pred_check_branch
        %142 = sbr.rel (%p140) target = $region16
      $region15: #{tpu_custom_call.1} parent=5 // pred_region
        // Predicated region
        $region17: #{tpu_custom_call.1} parent=15 // pred_check
          %p143 = pneg %p60
        $region18: #{tpu_custom_call.1} parent=15 // pred_check_branch
          %145 = sbr.rel (%p143) target = $region20
        $region19: #{tpu_custom_call.1} parent=15 // pred_region
          %s146 = sand.u32 %s50, 1
          %s147 = scalar_lea.sflag [#allocation3], %s146
          %s148 = sand.u32 %s50, 1
          %s149 = smul.addr %s148, 32
          %s150 = scalar_lea.vmem [#allocation2], %s149
          %s151 = smul.u32 4, %s26
          %s152 = smul.u32 2, %s25
          %154 = vsyncadd %s147, 0
          %s155 = smul.addr %s151, 2
          %s156 = sadd.s32 %s152, %s155
          %s157 = smul.addr %s24, 8
          %s158 = sadd.s32 %s156, %s157
          %s159 = smul.addr %s158, 4
          %s160 = scalar_lea.hbm %s0, %s159
          %s161 = sshll.u32 %s160, 4
          %s162 = int_to_ptr.hbm [resolvable:$true] %s161
          %s163 = sshll.u32 %s150, 4
          %s164 = int_to_ptr.vmem [resolvable:$true] %s163
          %169 = dma.hbm_to_vmem [thread:$0]  %s162, 512, %s164, %s147, 64, 64, 4
        $region20: #{tpu_custom_call.1} parent=15 // pred_fallthru
          _
        // Predicated region
        $region21: #{tpu_custom_call.1} parent=15 // pred_check
          %p170 = pneg %p88
        $region22: #{tpu_custom_call.1} parent=15 // pred_check_branch
          %172 = sbr.rel (%p170) target = $region24
        $region23: #{tpu_custom_call.1} parent=15 // pred_region
          %s173 = sand.u32 %s78, 1
          %s174 = scalar_lea.sflag [#allocation6], %s173
          %s175 = sand.u32 %s78, 1
          %s176 = smul.addr %s175, 8
          %s177 = scalar_lea.vmem [#allocation5], %s176
          %s178 = smul.u32 2, %s25
          %180 = vsyncadd %s174, 0
          %s181 = smul.addr %s24, 2
          %s182 = sadd.s32 %s178, %s181
          %s183 = smul.addr %s182, 4
          %s184 = scalar_lea.hbm %s1, %s183
          %s185 = sshll.u32 %s184, 4
          %s186 = int_to_ptr.hbm [resolvable:$true] %s185
          %s187 = sshll.u32 %s177, 4
          %s188 = int_to_ptr.vmem [resolvable:$true] %s187
          %193 = dma.hbm_to_vmem [thread:$0]  %s186, 128, %s188, %s174, 64, 64, 4
        $region24: #{tpu_custom_call.1} parent=15 // pred_fallthru
          _
      $region16: #{tpu_custom_call.1} parent=5 // pred_fallthru
        _
      %p194 = scmp.le.s32.totalorder 1, %s17
      %p195 = scmp.lt.s32.totalorder %s17, 3
      %p196 = pnand %p194, %p195
      %p197 = pneg %p196
      // Predicated region
      $region25: #{tpu_custom_call.1} parent=5 // pred_check
        _
      $region26: #{tpu_custom_call.1} parent=5 // pred_check_branch
        %199 = sbr.rel (%p196) target = $region28
      $region27: #{tpu_custom_call.1} parent=5 // pred_region
        %s200 = ssub.s32 %s17, 1
        %s201 = sand.u32 %s53, 1
        %s202 = scalar_lea.sflag [#allocation3], %s201
        %s203 = sand.u32 %s53, 1
        %s204 = smul.addr %s203, 32
        %s205 = scalar_lea.vmem [#allocation2], %s204
        // Predicated region
        $region29: #{tpu_custom_call.1} parent=27 // pred_check
          %p206 = pneg %p66
        $region30: #{tpu_custom_call.1} parent=27 // pred_check_branch
          %208 = sbr.rel (%p206) target = $region32
        $region31: #{tpu_custom_call.1} parent=27 // pred_region
          %210 = dma.done %s202, 512
        $region32: #{tpu_custom_call.1} parent=27 // pred_fallthru
          _
        %s211 = sand.u32 %s81, 1
        %s212 = scalar_lea.sflag [#allocation6], %s211
        %s213 = sand.u32 %s81, 1
        %s214 = smul.addr %s213, 8
        %s215 = scalar_lea.vmem [#allocation5], %s214
        // Predicated region
        $region33: #{tpu_custom_call.1} parent=27 // pred_check
          %p216 = pneg %p94
        $region34: #{tpu_custom_call.1} parent=27 // pred_check_branch
          %218 = sbr.rel (%p216) target = $region36
        $region35: #{tpu_custom_call.1} parent=27 // pred_region
          %220 = dma.done %s212, 128
        $region36: #{tpu_custom_call.1} parent=27 // pred_fallthru
          _
        %s221 = sand.u32 %s53, 1
        %s222 = scalar_lea.sflag [#allocation3], %s221
        %s223 = sand.u32 %s53, 1
        %s224 = smul.addr %s223, 32
        %s225 = scalar_lea.vmem [#allocation2], %s224
        %p226 = pneg %p66
        %p227 = pneg %p63
        %s228 = sand.u32 %s81, 1
        %s229 = scalar_lea.sflag [#allocation6], %s228
        %s230 = sand.u32 %s81, 1
        %s231 = smul.addr %s230, 8
        %s232 = scalar_lea.vmem [#allocation5], %s231
        %p233 = pneg %p94
        %p234 = pneg %p91
        %p235 = pneg %p124
        %p236 = pneg %p121
        %s237 = sand.u32 %s111, 1
        %s238 = scalar_lea.sflag [#allocation4], %s237
        %s239 = sand.u32 %s111, 1
        %s240 = smul.addr %s239, 32
        %s241 = scalar_lea.vmem [#allocation7], %s240
        %s242 = smul.u32 4, %s29
        %s243 = smul.u32 2, %s28
        %s244 = smul.u32 2, %s28
        %s245 = smul.u32 4, %s29
        %s246 = smul.u32 2, %s28
        %v247 = vld [vmem:[%s205] sm:$0xf]
        %v248 = vld [vmem:[%s205 + $0x4] sm:$0xf]
        %v249 = vld [vmem:[%s205 + $0x8] sm:$0xf]
        %v250 = vld [vmem:[%s205 + $0xc] sm:$0xf]
        %v251 = vld [vmem:[%s205 + $0x10] sm:$0xf]
        %v252 = vld [vmem:[%s205 + $0x14] sm:$0xf]
        %v253 = vld [vmem:[%s205 + $0x18] sm:$0xf]
        %v254 = vld [vmem:[%s205 + $0x1c] sm:$0xf]
        %v255 = vunpack.c.l.bf16 %v247
        %v256 = vunpack.c.l.bf16 %v248
        %v257 = vunpack.c.l.bf16 %v249
        %v258 = vunpack.c.l.bf16 %v250
        %v259 = vunpack.c.l.bf16 %v251
        %v260 = vunpack.c.l.bf16 %v252
        %v261 = vunpack.c.l.bf16 %v253
        %v262 = vunpack.c.l.bf16 %v254
        %v263 = vld [vmem:[%s215] sm:$0xf]
        %v264 = vld [vmem:[%s215 + $0x4] sm:$0xf]
        %v265 = vunpack.c.l.bf16 %v263
        %v266 = vunpack.c.l.bf16 %v264
        %v267 = vadd.f32 %v255, %v265
        %v268 = vadd.f32 %v256, %v266
        %v269 = vadd.f32 %v257, %v265
        %v270 = vadd.f32 %v258, %v266
        %v271 = vadd.f32 %v259, %v265
        %v272 = vadd.f32 %v260, %v266
        %v273 = vadd.f32 %v261, %v265
        %v274 = vadd.f32 %v262, %v266
        %275 = vmax.xlane.f32.xlu0 %v267
        %v276 = vpop.xlane.xlu0 %275
        %277 = vmax.xlane.f32.xlu0 %v268
        %v278 = vpop.xlane.xlu0 %277
        %279 = vmax.xlane.f32.xlu0 %v269
        %v280 = vpop.xlane.xlu0 %279
        %281 = vmax.xlane.f32.xlu0 %v270
        %v282 = vpop.xlane.xlu0 %281
        %283 = vmax.xlane.f32.xlu0 %v271
        %v284 = vpop.xlane.xlu0 %283
        %285 = vmax.xlane.f32.xlu0 %v272
        %v286 = vpop.xlane.xlu0 %285
        %287 = vmax.xlane.f32.xlu0 %v273
        %v288 = vpop.xlane.xlu0 %287
        %289 = vmax.xlane.f32.xlu0 %v274
        %v290 = vpop.xlane.xlu0 %289
        %v291 = vsub.f32 %v267, %v276
        %v292 = vsub.f32 %v268, %v278
        %v293 = vsub.f32 %v269, %v280
        %v294 = vsub.f32 %v270, %v282
        %v295 = vsub.f32 %v271, %v284
        %v296 = vsub.f32 %v272, %v286
        %v297 = vsub.f32 %v273, %v288
        %v298 = vsub.f32 %v274, %v290
        %v299 = vmul.f32 %v291, 1.442695
        %v300 = vpow.pop %v299
        %v301 = vmul.f32 %v292, 1.442695
        %v302 = vpow.pop %v301
        %v303 = vmul.f32 %v293, 1.442695
        %v304 = vpow.pop %v303
        %v305 = vmul.f32 %v294, 1.442695
        %v306 = vpow.pop %v305
        %v307 = vmul.f32 %v295, 1.442695
        %v308 = vpow.pop %v307
        %v309 = vmul.f32 %v296, 1.442695
        %v310 = vpow.pop %v309
        %v311 = vmul.f32 %v297, 1.442695
        %v312 = vpow.pop %v311
        %v313 = vmul.f32 %v298, 1.442695
        %v314 = vpow.pop %v313
        %315 = vadd.xlane.f32.xlu0 %v300
        %v316 = vpop.xlane.xlu0 %315
        %317 = vadd.xlane.f32.xlu0 %v302
        %v318 = vpop.xlane.xlu0 %317
        %319 = vadd.xlane.f32.xlu0 %v304
        %v320 = vpop.xlane.xlu0 %319
        %321 = vadd.xlane.f32.xlu0 %v306
        %v322 = vpop.xlane.xlu0 %321
        %323 = vadd.xlane.f32.xlu0 %v308
        %v324 = vpop.xlane.xlu0 %323
        %325 = vadd.xlane.f32.xlu0 %v310
        %v326 = vpop.xlane.xlu0 %325
        %327 = vadd.xlane.f32.xlu0 %v312
        %v328 = vpop.xlane.xlu0 %327
        %329 = vadd.xlane.f32.xlu0 %v314
        %v330 = vpop.xlane.xlu0 %329
        %v331 = vrcp.pop %v316
        %v332 = vmul.f32 %v316, %v331
        %v333 = vsub.f32 1.0, %v332
        %v334 = vmul.f32 %v331, %v333
        %v335 = vadd.f32 %v331, %v334
        %vm336 = vweird.f32 %v316
        %vm337 = vweird.f32 %v331
        %vm338 = vmor %vm336, %vm337
        %v339 = vsel %vm338, %v331, %v335
        %v340 = vand.u32 2147483647, %v316
        %vm341 = vcmp.eq.f32.partialorder %v340, 8.507059e+37
        %v342 = vand.u32 %v316, 2147483648
        %v343 = vor.u32 1.1754944e-38, %v342
        %v344 = vsel %vm341, %v343, %v339
        %v345 = vmul.f32 1.0, %v344
        %v346 = vrcp.pop %v318
        %v347 = vmul.f32 %v318, %v346
        %v348 = vsub.f32 1.0, %v347
        %v349 = vmul.f32 %v346, %v348
        %v350 = vadd.f32 %v346, %v349
        %vm351 = vweird.f32 %v318
        %vm352 = vweird.f32 %v346
        %vm353 = vmor %vm351, %vm352
        %v354 = vsel %vm353, %v346, %v350
        %v355 = vand.u32 2147483647, %v318
        %vm356 = vcmp.eq.f32.partialorder %v355, 8.507059e+37
        %v357 = vand.u32 %v318, 2147483648
        %v358 = vor.u32 1.1754944e-38, %v357
        %v359 = vsel %vm356, %v358, %v354
        %v360 = vmul.f32 1.0, %v359
        %v361 = vrcp.pop %v320
        %v362 = vmul.f32 %v320, %v361
        %v363 = vsub.f32 1.0, %v362
        %v364 = vmul.f32 %v361, %v363
        %v365 = vadd.f32 %v361, %v364
        %vm366 = vweird.f32 %v320
        %vm367 = vweird.f32 %v361
        %vm368 = vmor %vm366, %vm367
        %v369 = vsel %vm368, %v361, %v365
        %v370 = vand.u32 2147483647, %v320
        %vm371 = vcmp.eq.f32.partialorder %v370, 8.507059e+37
        %v372 = vand.u32 %v320, 2147483648
        %v373 = vor.u32 1.1754944e-38, %v372
        %v374 = vsel %vm371, %v373, %v369
        %v375 = vmul.f32 1.0, %v374
        %v376 = vrcp.pop %v322
        %v377 = vmul.f32 %v322, %v376
        %v378 = vsub.f32 1.0, %v377
        %v379 = vmul.f32 %v376, %v378
        %v380 = vadd.f32 %v376, %v379
        %vm381 = vweird.f32 %v322
        %vm382 = vweird.f32 %v376
        %vm383 = vmor %vm381, %vm382
        %v384 = vsel %vm383, %v376, %v380
        %v385 = vand.u32 2147483647, %v322
        %vm386 = vcmp.eq.f32.partialorder %v385, 8.507059e+37
        %v387 = vand.u32 %v322, 2147483648
        %v388 = vor.u32 1.1754944e-38, %v387
        %v389 = vsel %vm386, %v388, %v384
        %v390 = vmul.f32 1.0, %v389
        %v391 = vrcp.pop %v324
        %v392 = vmul.f32 %v324, %v391
        %v393 = vsub.f32 1.0, %v392
        %v394 = vmul.f32 %v391, %v393
        %v395 = vadd.f32 %v391, %v394
        %vm396 = vweird.f32 %v324
        %vm397 = vweird.f32 %v391
        %vm398 = vmor %vm396, %vm397
        %v399 = vsel %vm398, %v391, %v395
        %v400 = vand.u32 2147483647, %v324
        %vm401 = vcmp.eq.f32.partialorder %v400, 8.507059e+37
        %v402 = vand.u32 %v324, 2147483648
        %v403 = vor.u32 1.1754944e-38, %v402
        %v404 = vsel %vm401, %v403, %v399
        %v405 = vmul.f32 1.0, %v404
        %v406 = vrcp.pop %v326
        %v407 = vmul.f32 %v326, %v406
        %v408 = vsub.f32 1.0, %v407
        %v409 = vmul.f32 %v406, %v408
        %v410 = vadd.f32 %v406, %v409
        %vm411 = vweird.f32 %v326
        %vm412 = vweird.f32 %v406
        %vm413 = vmor %vm411, %vm412
        %v414 = vsel %vm413, %v406, %v410
        %v415 = vand.u32 2147483647, %v326
        %vm416 = vcmp.eq.f32.partialorder %v415, 8.507059e+37
        %v417 = vand.u32 %v326, 2147483648
        %v418 = vor.u32 1.1754944e-38, %v417
        %v419 = vsel %vm416, %v418, %v414
        %v420 = vmul.f32 1.0, %v419
        %v421 = vrcp.pop %v328
        %v422 = vmul.f32 %v328, %v421
        %v423 = vsub.f32 1.0, %v422
        %v424 = vmul.f32 %v421, %v423
        %v425 = vadd.f32 %v421, %v424
        %vm426 = vweird.f32 %v328
        %vm427 = vweird.f32 %v421
        %vm428 = vmor %vm426, %vm427
        %v429 = vsel %vm428, %v421, %v425
        %v430 = vand.u32 2147483647, %v328
        %vm431 = vcmp.eq.f32.partialorder %v430, 8.507059e+37
        %v432 = vand.u32 %v328, 2147483648
        %v433 = vor.u32 1.1754944e-38, %v432
        %v434 = vsel %vm431, %v433, %v429
        %v435 = vmul.f32 1.0, %v434
        %v436 = vrcp.pop %v330
        %v437 = vmul.f32 %v330, %v436
        %v438 = vsub.f32 1.0, %v437
        %v439 = vmul.f32 %v436, %v438
        %v440 = vadd.f32 %v436, %v439
        %vm441 = vweird.f32 %v330
        %vm442 = vweird.f32 %v436
        %vm443 = vmor %vm441, %vm442
        %v444 = vsel %vm443, %v436, %v440
        %v445 = vand.u32 2147483647, %v330
        %vm446 = vcmp.eq.f32.partialorder %v445, 8.507059e+37
        %v447 = vand.u32 %v330, 2147483648
        %v448 = vor.u32 1.1754944e-38, %v447
        %v449 = vsel %vm446, %v448, %v444
        %v450 = vmul.f32 1.0, %v449
        %v451 = vmul.f32 %v300, %v345
        %v452 = vmul.f32 %v302, %v360
        %v453 = vmul.f32 %v304, %v375
        %v454 = vmul.f32 %v306, %v390
        %v455 = vmul.f32 %v308, %v405
        %v456 = vmul.f32 %v310, %v420
        %v457 = vmul.f32 %v312, %v435
        %v458 = vmul.f32 %v314, %v450
        %v459 = vpack.c.bf16 %v451, %v451
        %v460 = vpack.c.bf16 %v452, %v452
        %v461 = vpack.c.bf16 %v453, %v453
        %v462 = vpack.c.bf16 %v454, %v454
        %v463 = vpack.c.bf16 %v455, %v455
        %v464 = vpack.c.bf16 %v456, %v456
        %v465 = vpack.c.bf16 %v457, %v457
        %v466 = vpack.c.bf16 %v458, %v458
        %467 = vst [vmem:[%s241] sm:$0xf] %v459
        %468 = vst [vmem:[%s241 + $0x4] sm:$0xf] %v460
        %469 = vst [vmem:[%s241 + $0x8] sm:$0xf] %v461
        %470 = vst [vmem:[%s241 + $0xc] sm:$0xf] %v462
        %471 = vst [vmem:[%s241 + $0x10] sm:$0xf] %v463
        %472 = vst [vmem:[%s241 + $0x14] sm:$0xf] %v464
        %473 = vst [vmem:[%s241 + $0x18] sm:$0xf] %v465
        %474 = vst [vmem:[%s241 + $0x1c] sm:$0xf] %v466
        %s475 = sand.u32 %s111, 1
        %s476 = scalar_lea.sflag [#allocation4], %s475
        %s477 = sand.u32 %s111, 1
        %s478 = smul.addr %s477, 32
        %s479 = scalar_lea.vmem [#allocation7], %s478
        // Predicated region
        $region37: #{tpu_custom_call.1} parent=27 // pred_check
          %p480 = pneg %p121
        $region38: #{tpu_custom_call.1} parent=27 // pred_check_branch
          %482 = sbr.rel (%p480) target = $region40
        $region39: #{tpu_custom_call.1} parent=27 // pred_region
          %s483 = smul.u32 4, %s29
          %s484 = smul.u32 2, %s28
          %486 = vsyncadd %s476, 0
          %s487 = smul.addr %s483, 2
          %s488 = sadd.s32 %s484, %s487
          %s489 = smul.addr %s27, 8
          %s490 = sadd.s32 %s488, %s489
          %s491 = smul.addr %s490, 4
          %s492 = scalar_lea.hbm %s2, %s491
          %s493 = sshll.u32 %s479, 4
          %s494 = int_to_ptr.vmem [resolvable:$true] %s493
          %s495 = sshll.u32 %s492, 4
          %s496 = int_to_ptr.hbm [resolvable:$true] %s495
          %501 = dma.vmem_to_hbm [thread:$0]  %s494, 512, %s496, %s476, 64, 64, 4
        $region40: #{tpu_custom_call.1} parent=27 // pred_fallthru
          _
      $region28: #{tpu_custom_call.1} parent=5 // pred_fallthru
        _
      %p502 = scmp.le.s32.totalorder 2, %s17
      // Predicated region
      $region41: #{tpu_custom_call.1} parent=5 // pred_check
        %p503 = pneg %p502
      $region42: #{tpu_custom_call.1} parent=5 // pred_check_branch
        %505 = sbr.rel (%p503) target = $region44
      $region43: #{tpu_custom_call.1} parent=5 // pred_region
        %s506 = ssub.s32 %s17, 2
        // Predicated region
        $region45: #{tpu_custom_call.1} parent=43 // pred_check
          %p507 = pneg %p127
        $region46: #{tpu_custom_call.1} parent=43 // pred_check_branch
          %509 = sbr.rel (%p507) target = $region48
        $region47: #{tpu_custom_call.1} parent=43 // pred_region
          %s510 = sand.u32 %s112, 1
          %s511 = scalar_lea.sflag [#allocation4], %s510
          %s512 = sand.u32 %s112, 1
          %s513 = smul.addr %s512, 32
          %s514 = scalar_lea.vmem [#allocation7], %s513
          %516 = dma.done %s511, 512
        $region48: #{tpu_custom_call.1} parent=43 // pred_fallthru
          _
      $region44: #{tpu_custom_call.1} parent=5 // pred_fallthru
        _
    $region6: #{tpu_custom_call.1} parent=1 // loop_footer
      %s21 = sadd.s32 1, %s17
    $region7: #{tpu_custom_call.1} parent=1 // loop_footer_branch
      %16 = sbr.rel target = $region3
    $region8: #{tpu_custom_call.1} parent=1 // loop_exit
      _
    %517 = vsyncpa [#allocation3], 1
    %s518 = scalar_lea.sflag [#allocation3], 1
    %519 = vsyncpa %s518, 1
    %520 = vsyncpa [#allocation6], 1
    %s521 = scalar_lea.sflag [#allocation6], 1
    %522 = vsyncpa %s521, 1
    %523 = vsyncpa [#allocation4], 1
    %s524 = scalar_lea.sflag [#allocation4], 1
    %525 = vsyncpa %s524, 1

</llo_original>
